<compile_context>
chip_gen: v6e
topology: v6e:2x2x1
jax: 0.10.0
libtpu: 0.0.40
codegen_flags: <defaults>
</compile_context>

<pallas_src>
import jax
import jax.numpy as jnp
from jax import lax
from jax.experimental import pallas as pl
from jax.experimental.pallas import tpu as pltpu


# ----------------------------------------------------------------------------
# Hardware / tiling helpers
# ----------------------------------------------------------------------------
def _vmem_budget_bytes() -> int:
    """~70% of physical VMEM (v5e/v6e: 128 MiB -> ~90 MiB, v7x: 64 MiB -> ~45 MiB)."""
    try:
        info = pltpu.get_tpu_info()
        cap = int(getattr(info, "vmem_capacity_bytes", 64 * 1024 * 1024))
    except Exception:
        cap = 64 * 1024 * 1024  # conservative default (v7x per-TC size)
    return min(int(cap * 7 // 10), 96 * 1024 * 1024)


def _round_up(x: int, m: int) -> int:
    return ((x + m - 1) // m) * m


def _par_tile(dim: int, pref: int, align: int) -> int:
    """Tile for a NON-contraction dim: full extent if small, else an aligned
    tile; the grid uses cdiv and boundary blocks are masked on store."""
    if dim <= pref:
        return dim
    return max(align, (pref // align) * align)


def _choose_k_tile(H: int, k_bytes_per_elem: int, fixed_bytes: int, budget: int):
    """K tile for the (rare) K-split fallback: a multiple-of-128 divisor of a
    (possibly zero-padded) H such that the working set fits `budget`."""
    max_tk = (budget - fixed_bytes) // max(k_bytes_per_elem, 1)
    max_tk = max(128, (max_tk // 128) * 128)
    t = max_tk
    while t >= 128:
        if H % t == 0:
            return t, H
        t -= 128
    t = min(max_tk, 512)
    return t, _round_up(H, t)  # caller zero-pads H (contraction dim) to Hp


# ----------------------------------------------------------------------------
# Shared projection: one Linear(H -> D) applied to all B*N tokens.
# ----------------------------------------------------------------------------
def _shared_kernel_nok(x_ref, w_ref, b_ref, o_ref):
    # x: (tm, H), w: (td, H) [PyTorch (D,H) layout], b: (1, td), o: (tm, td)
    acc = lax.dot_general(
        x_ref[...], w_ref[...],
        dimension_numbers=(((1,), (1,)), ((), ())),      # contract H (last dims)
        preferred_element_type=jnp.float32,
    )
    o_ref[...] = (acc + b_ref[...].astype(jnp.float32)).astype(o_ref.dtype)


def _shared_kernel_ksplit(x_ref, w_ref, b_ref, o_ref, acc_ref):
    # Fallback for very large H: f32 accumulator, K innermost & "arbitrary".
    k = pl.program_id(2)

    @pl.when(k == 0)
    def _():
        acc_ref[...] = jnp.zeros_like(acc_ref)

    acc_ref[...] += lax.dot_general(
        x_ref[...], w_ref[...],
        dimension_numbers=(((1,), (1,)), ((), ())),
        preferred_element_type=jnp.float32,
    )

    @pl.when(k == pl.num_programs(2) - 1)
    def _():
        o_ref[...] = (acc_ref[...] + b_ref[...].astype(jnp.float32)).astype(o_ref.dtype)


def hidden2prompt_shared(x, weight, bias, *, compute_dtype=None):
    """x: (B,N,H); weight: (D,H) [PyTorch nn.Linear]; bias: (D,) -> (B,N,D)."""
    B, N, H = x.shape
    D = weight.shape[0]
    M = B * N
    out_dtype = x.dtype

    if compute_dtype is not None:
        x = x.astype(compute_dtype)
        weight = weight.astype(compute_dtype)
    xb, wb = x.dtype.itemsize, weight.dtype.itemsize
    bb, ob = bias.dtype.itemsize, jnp.zeros((), out_dtype).dtype.itemsize

    x2 = x.reshape(M, H)          # contiguous reshape: free, no HBM copy
    b2 = bias.reshape(1, D)

    budget = _vmem_budget_bytes()
    tm = _par_tile(M, 512, 8)

    def ws(tm_, td_, tk_):        # double-buffered working set estimate
        return 2 * (tm_ * tk_ * xb + td_ * tk_ * wb + td_ * bb + tm_ * td_ * ob)

    td_cands = ([D] if D <= 1024 else []) + [c for c in (1024, 512, 256, 128) if c < D]

    # ---- preferred path: collapse the K axis (full-H strips) ---------------
    td = next((c for c in td_cands if ws(tm, c, H) <= budget), None)
    if td is None and tm > 8:
        tm = _par_tile(M, 128, 8)
        td = next((c for c in td_cands if ws(tm, c, H) <= budget), None)

    if td is not None:
        # megacore (v7x): keep >= 2 parallel iterations when possible.
        if pl.cdiv(M, tm) * pl.cdiv(D, td) < 2 and D >= 256:
            td = max(128, _round_up(pl.cdiv(D, 2), 128))
        grid = (pl.cdiv(M, tm), pl.cdiv(D, td))
        out2 = pl.pallas_call(
            _shared_kernel_nok,
            out_shape=jax.ShapeDtypeStruct((M, D), out_dtype),
            grid_spec=pltpu.PrefetchScalarGridSpec(
                num_scalar_prefetch=0,
                grid=grid,
                in_specs=[
                    pl.BlockSpec((tm, H), lambda i, j: (i, 0)),
                    pl.BlockSpec((td, H), lambda i, j: (j, 0)),
                    pl.BlockSpec((1, td), lambda i, j: (0, j)),
                ],
                out_specs=pl.BlockSpec((tm, td), lambda i, j: (i, j)),
            ),
            compiler_params=pltpu.CompilerParams(
                dimension_semantics=("parallel", "parallel"),
                vmem_limit_bytes=budget,
            ),
        )(x2, weight, b2)
        return out2.reshape(B, N, D)

    # ---- fallback: K-split reduction (very large H only) -------------------
    td = 256 if D > 256 else D
    k_bytes = 2 * (tm * xb + td * wb)
    fixed = 2 * (td * bb + tm * td * ob) + tm * td * 4
    tk, Hp = _choose_k_tile(H, k_bytes, fixed, budget)
    if Hp != H:  # zero-pad the contraction dim (safe; rare)
        x2 = jnp.pad(x2, ((0, 0), (0, Hp - H)))
        weight = jnp.pad(weight, ((0, 0), (0, Hp - H)))
    grid = (pl.cdiv(M, tm), pl.cdiv(D, td), Hp // tk)
    out2 = pl.pallas_call(
        _shared_kernel_ksplit,
        out_shape=jax.ShapeDtypeStruct((M, D), out_dtype),
        grid_spec=pltpu.PrefetchScalarGridSpec(
            num_scalar_prefetch=0,
            grid=grid,
            in_specs=[
                pl.BlockSpec((tm, tk), lambda i, j, k: (i, k)),
                pl.BlockSpec((td, tk), lambda i, j, k: (j, k)),
                pl.BlockSpec((1, td), lambda i, j, k: (0, j)),
            ],
            out_specs=pl.BlockSpec((tm, td), lambda i, j, k: (i, j)),
            scratch_shapes=[pltpu.VMEM((tm, td), jnp.float32)],
        ),
        compiler_params=pltpu.CompilerParams(
            dimension_semantics=("parallel", "parallel", "arbitrary"),
            vmem_limit_bytes=budget,
        ),
    )(x2, weight, b2)
    return out2.reshape(B, N, D)


# ----------------------------------------------------------------------------
# Full (per-token) projection: one Linear per virtual token.
# ----------------------------------------------------------------------------
def _full_kernel_nok(x_ref, w_ref, b_ref, o_ref):
    # x: (B, tn, H), w: (tn, td, H) [PyTorch (N,D,H)], b: (tn, td), o: (B, tn, td)
    tn = x_ref.shape[1]
    bias = b_ref[...].astype(jnp.float32)
    for t in range(tn):                      # static unroll; tn is small
        acc = lax.dot_general(
            x_ref[:, t, :], w_ref[t],
            dimension_numbers=(((1,), (1,)), ((), ())),   # contract H
            preferred_element_type=jnp.float32,
        )
        o_ref[:, t, :] = (acc + bias[t:t + 1, :]).astype(o_ref.dtype)


def _full_kernel_ksplit(x_ref, w_ref, b_ref, o_ref, acc_ref):
    # Fallback for very large H.  (For f32 outputs the accumulator could live
    # directly in o_ref; kept as scratch for dtype-generality in this rare path.)
    tn = x_ref.shape[1]
    k = pl.program_id(2)

    @pl.when(k == 0)
    def _():
        acc_ref[...] = jnp.zeros_like(acc_ref)

    for t in range(tn):
        acc_ref[:, t, :] += lax.dot_general(
            x_ref[:, t, :], w_ref[t],
            dimension_numbers=(((1,), (1,)), ((), ())),
            preferred_element_type=jnp.float32,
        )

    @pl.when(k == pl.num_programs(2) - 1)
    def _():
        bias = b_ref[...].astype(jnp.float32)
        o_ref[...] = (acc_ref[...] + bias[None, :, :]).astype(o_ref.dtype)


def hidden2prompt_full(x, weights, biases, *, compute_dtype=None):
    """x: (B,N,H); weights: (N,D,H) [PyTorch]; biases: (N,D) -> (B,N,D)."""
    B, N, H = x.shape
    D = weights.shape[1]
    out_dtype = x.dtype

    if compute_dtype is not None:
        x = x.astype(compute_dtype)
        weights = weights.astype(compute_dtype)
    xb, wb = x.dtype.itemsize, weights.dtype.itemsize
    bb, ob = biases.dtype.itemsize, jnp.zeros((), out_dtype).dtype.itemsize

    budget = _vmem_budget_bytes()
    tn = _par_tile(N, 8, 8)       # 8-aligned token tile (or full N when small)

    def ws(tn_, td_, tk_):
        return 2 * (B * tn_ * tk_ * xb + tn_ * td_ * tk_ * wb
                    + tn_ * td_ * bb + B * tn_ * td_ * ob)

    td_cands = ([D] if D <= 1024 else []) + [c for c in (1024, 512, 256, 128) if c < D]

    # ---- preferred path: collapse the K axis (full-H strips) ---------------
    td = next((c for c in td_cands if ws(tn, c, H) <= budget), None)
    if td is not None:
        if pl.cdiv(N, tn) * pl.cdiv(D, td) < 2 and D >= 256:
            td = max(128, _round_up(pl.cdiv(D, 2), 128))
        grid = (pl.cdiv(N, tn), pl.cdiv(D, td))
        return pl.pallas_call(
            _full_kernel_nok,
            out_shape=jax.ShapeDtypeStruct((B, N, D), out_dtype),
            grid_spec=pltpu.PrefetchScalarGridSpec(
                num_scalar_prefetch=0,
                grid=grid,
                in_specs=[
                    pl.BlockSpec((B, tn, H), lambda n, j: (0, n, 0)),
                    pl.BlockSpec((tn, td, H), lambda n, j: (n, j, 0)),
                    pl.BlockSpec((tn, td), lambda n, j: (n, j)),
                ],
                out_specs=pl.BlockSpec((B, tn, td), lambda n, j: (0, n, j)),
            ),
            compiler_params=pltpu.CompilerParams(
                dimension_semantics=("parallel", "parallel"),
                vmem_limit_bytes=budget,
            ),
        )(x, weights, biases)

    # ---- fallback: K-split reduction (very large H only) -------------------
    td = 256 if D > 256 else D
    k_bytes = 2 * (B * tn * xb + tn * td * wb)
    fixed = 2 * (tn * td * bb + B * tn * td * ob) + B * tn * td * 4
    tk, Hp = _choose_k_tile(H, k_bytes, fixed, budget)
    if Hp != H:
        x = jnp.pad(x, ((0, 0), (0, 0), (0, Hp - H)))
        weights = jnp.pad(weights, ((0, 0), (0, 0), (0, Hp - H)))
    grid = (pl.cdiv(N, tn), pl.cdiv(D, td), Hp // tk)
    return pl.pallas_call(
        _full_kernel_ksplit,
        out_shape=jax.ShapeDtypeStruct((B, N, D), out_dtype),
        grid_spec=pltpu.PrefetchScalarGridSpec(
            num_scalar_prefetch=0,
            grid=grid,
            in_specs=[
                pl.BlockSpec((B, tn, tk), lambda n, j, k: (0, n, k)),
                pl.BlockSpec((tn, td, tk), lambda n, j, k: (n, j, k)),
                pl.BlockSpec((tn, td), lambda n, j, k: (n, j)),
            ],
            out_specs=pl.BlockSpec((B, tn, td), lambda n, j, k: (0, n, j)),
            scratch_shapes=[pltpu.VMEM((B, tn, td), jnp.float32)],
        ),
        compiler_params=pltpu.CompilerParams(
            dimension_semantics=("parallel", "parallel", "arbitrary"),
            vmem_limit_bytes=budget,
        ),
    )(x, weights, biases)


if __name__ == "__main__":
    key = jax.random.PRNGKey(0)
    k_x, k_ws, k_bs, k_wf, k_bf = jax.random.split(key, 5)

    B = 2        # batch
    N = 8        # num_virtual_tokens
    H_ENC = 32   # encoder hidden size
    D_DEC = 64   # decoder hidden size

    x = jax.random.normal(k_x, (B, N, H_ENC), dtype=jnp.float32)

    # nn.Linear parameter layouts: weight [out, in], bias [out].
    w_shared = jax.random.normal(k_ws, (D_DEC, H_ENC), dtype=jnp.float32) * 0.02
    b_shared = jax.random.normal(k_bs, (D_DEC,), dtype=jnp.float32) * 0.02
    w_full = jax.random.normal(k_wf, (N, D_DEC, H_ENC), dtype=jnp.float32) * 0.02
    b_full = jax.random.normal(k_bf, (N, D_DEC), dtype=jnp.float32) * 0.02

    ref_shared = jnp.einsum("bnh,dh->bnd", x, w_shared) + b_shared
    ref_full = jnp.einsum("bnh,ndh->bnd", x, w_full) + b_full

    # ---- f32 (module-exact semantics) ----
    out_shared = jax.block_until_ready(hidden2prompt_shared(x, w_shared, b_shared))
    assert out_shared.shape == (B, N, D_DEC)
    assert jnp.allclose(out_shared, ref_shared, atol=1e-5, rtol=1e-5)

    out_full = jax.block_until_ready(hidden2prompt_full(x, w_full, b_full))
    assert out_full.shape == (B, N, D_DEC)
    assert jnp.allclose(out_full, ref_full, atol=1e-5, rtol=1e-5)

    # ---- bf16 operands (perf-review option): f32 accumulation, looser tol ----
    out_shared_bf = jax.block_until_ready(
        hidden2prompt_shared(x, w_shared, b_shared, compute_dtype=jnp.bfloat16))
    assert jnp.allclose(out_shared_bf, ref_shared, atol=2e-2, rtol=2e-2)

    out_full_bf = jax.block_until_ready(
        hidden2prompt_full(x, w_full, b_full, compute_dtype=jnp.bfloat16))
    assert jnp.allclose(out_full_bf, ref_full, atol=2e-2, rtol=2e-2)

    print("KERNEL_OK")
</pallas_src>

<mosaic_0001>
module attributes {stable_mosaic.version = 11 : i64} {
  func.func @_shared_kernel_nok(%arg0: i32, %arg1: i32, %arg2: memref<16x32xf32, #tpu.memory_space<vmem>>, %arg3: memref<64x32xf32, #tpu.memory_space<vmem>>, %arg4: memref<1x64xf32, #tpu.memory_space<vmem>>, %arg5: memref<16x64xf32, #tpu.memory_space<vmem>>) attributes {dimension_semantics = [#tpu.dimension_semantics<parallel>, #tpu.dimension_semantics<parallel>], iteration_bounds = array<i64: 1, 1>, scalar_prefetch = 0 : i64, scratch_operands = 0 : i64, tpu.core_type = #tpu.core_type<tc>, window_params = [{transform_indices = @transform_0, window_bounds = array<i64: 16, 32>}, {transform_indices = @transform_1, window_bounds = array<i64: 64, 32>}, {transform_indices = @transform_2, window_bounds = array<i64: 1, 64>}, {transform_indices = @transform_3, window_bounds = array<i64: 16, 64>}]} {
    %c0 = arith.constant 0 : index
    %c0_0 = arith.constant 0 : index
    %0 = vector.load %arg2[%c0, %c0_0] : memref<16x32xf32, #tpu.memory_space<vmem>>, vector<16x32xf32>
    %c0_1 = arith.constant 0 : index
    %c0_2 = arith.constant 0 : index
    %1 = vector.load %arg3[%c0_1, %c0_2] : memref<64x32xf32, #tpu.memory_space<vmem>>, vector<64x32xf32>
    %cst = arith.constant dense<0.000000e+00> : vector<16x64xf32>
    %2 = tpu.matmul %0, %1, %cst {dimension_numbers = #tpu.dot_dimension_numbers<[1], [1], [0], [0], [0, 0, 1, 0], [], []>} : vector<16x32xf32>, vector<64x32xf32>, vector<16x64xf32> -> vector<16x64xf32>
    %c0_3 = arith.constant 0 : index
    %c0_4 = arith.constant 0 : index
    %3 = vector.load %arg4[%c0_3, %c0_4] : memref<1x64xf32, #tpu.memory_space<vmem>>, vector<1x64xf32>
    %4 = vector.broadcast %3 : vector<1x64xf32> to vector<16x64xf32>
    %5 = arith.addf %2, %4 : vector<16x64xf32>
    %c0_5 = arith.constant 0 : index
    %c0_6 = arith.constant 0 : index
    %6 = vector.load %arg5[%c0_5, %c0_6] : memref<16x64xf32, #tpu.memory_space<vmem>>, vector<16x64xf32>
    tpu.vector_store %arg5[%c0_5, %c0_6], %5 {strides = array<i32>} : memref<16x64xf32, #tpu.memory_space<vmem>>, vector<16x64xf32>,
    return
  }
  func.func @transform_0(%arg0: i32, %arg1: i32) -> (i32, i32) {
    %c0_i32 = arith.constant 0 : i32
    %c0_i32_0 = arith.constant 0 : i32
    return %arg0, %c0_i32 : i32, i32
  }
  func.func @transform_1(%arg0: i32, %arg1: i32) -> (i32, i32) {
    %c0_i32 = arith.constant 0 : i32
    %c0_i32_0 = arith.constant 0 : i32
    return %arg1, %c0_i32 : i32, i32
  }
  func.func @transform_2(%arg0: i32, %arg1: i32) -> (i32, i32) {
    %c0_i32 = arith.constant 0 : i32
    %c0_i32_0 = arith.constant 0 : i32
    return %c0_i32, %arg1 : i32, i32
  }
  func.func @transform_3(%arg0: i32, %arg1: i32) -> (i32, i32) {
    %c0_i32 = arith.constant 0 : i32
    return %arg0, %arg1 : i32, i32
  }
}

</mosaic_0001>

<llo_original>
// kernel: tpu_custom_call.1
$region0: #{tpu_custom_call.1}
  #allocation0 [shape = 'u32[]', space=smem, size = 0x4, offset = 0x4, fixed_abs, tag = 'smem constant byte address 0x4 - core index']
  #allocation1 [shape = 'u32[144,128]{1,0:T(1,128)}', space=vmem, size = 0x12000, scoped, tag = 'internal scratch']
  %s0 = inlined_call_operand.vmem [shape: f32[16,32], index: 0, kind: input, shape index: {}]
  %s1 = inlined_call_operand.vmem [shape: f32[64,32], index: 1, kind: input, shape index: {}]
  %s2 = inlined_call_operand.vmem [shape: f32[1,64], index: 2, kind: input, shape index: {}]
  %s3 = inlined_call_operand.hbm [shape: f32[16,64], index: 3, kind: output, shape index: {}]
  %s4 = sld [smem:[#allocation0]]
  $region22: #{tpu_custom_call.1} parent=0
    _
  %s6 = ssub.s32 1, %s4
  %s7 = scalar_select 0, %s6, %s4
  $region1: #{tpu_custom_call.1} parent=0
    #allocation2 [shape = 'u8[8192]{0}', space=vmem, size = 0x2000, scoped, tag = 'output window, operand 0, single buffered']
    #allocation3 [shape = 's32[1]{0}', space=sflag, size = 0x4, scoped, tag = 'scoped memory for tpu_custom_call.1']
    %8 = vsyncpa [#allocation3], 0
    // Predicated region
    $region2: #{tpu_custom_call.1} parent=1 // pred_check
      _
    $region3: #{tpu_custom_call.1} parent=1 // pred_check_branch
      %10 = sbr.rel (0) target = $region5
    $region4: #{tpu_custom_call.1} parent=1 // pred_region
      _
    $region5: #{tpu_custom_call.1} parent=1 // pred_fallthru
      _
    // Predicated region
    $region6: #{tpu_custom_call.1} parent=1 // pred_check
      _
    $region7: #{tpu_custom_call.1} parent=1 // pred_check_branch
      %12 = sbr.rel (0) target = $region9
    $region8: #{tpu_custom_call.1} parent=1 // pred_region
      _
    $region9: #{tpu_custom_call.1} parent=1 // pred_fallthru
      _
    // Predicated region
    $region10: #{tpu_custom_call.1} parent=1 // pred_check
      _
    $region11: #{tpu_custom_call.1} parent=1 // pred_check_branch
      %14 = sbr.rel (0) target = $region13
    $region12: #{tpu_custom_call.1} parent=1 // pred_region
      _
    $region13: #{tpu_custom_call.1} parent=1 // pred_fallthru
      _
    %v15 = vld [vmem:[%s0] sm:$0xff]
    %v16 = vld [vmem:[%s0 + $0x8] sm:$0xff]
    %v17 = vld [vmem:[%s1] sm:$0xff]
    %v18 = vld [vmem:[%s1 + $0x8] sm:$0xff]
    %v19 = vld [vmem:[%s1 + $0x10] sm:$0xff]
    %v20 = vld [vmem:[%s1 + $0x18] sm:$0xff]
    %v21 = vld [vmem:[%s1 + $0x20] sm:$0xff]
    %v22 = vld [vmem:[%s1 + $0x28] sm:$0xff]
    %v23 = vld [vmem:[%s1 + $0x30] sm:$0xff]
    %v24 = vld [vmem:[%s1 + $0x38] sm:$0xff]
    %v25 = vld [vmem:[%s2] sm:$0x1]
    %v27 = vlaneseq
    %v28 = vshrl.u32 %v27, 7
    %v29 = vsub.s32 0, %v28
    %v30 = vrot.slane %v25, %v29
    %vm32 = vcmask 261120
    %v34 = vsel %vm32, %v15, 0
    %v37 = vsel %vm32, %v16, 0
    %v40 = vsel %vm32, %v17, 0
    %v43 = vsel %vm32, %v18, 0
    %v46 = vsel %vm32, %v19, 0
    %v49 = vsel %vm32, %v20, 0
    %v52 = vsel %vm32, %v21, 0
    %v55 = vsel %vm32, %v22, 0
    %v58 = vsel %vm32, %v23, 0
    %v61 = vsel %vm32, %v24, 0
    %63 = vmatprep.subr.mxu0 0.0
    %64 = vmatpush1.xpose.msra.mxu0 0.0
    %65 = vmatprep.subr.mxu0 0.0
    %66 = vmatpush1.xpose.msra.mxu0 0.0
    %67 = vmatprep.subr.mxu0 0.0
    %68 = vmatpush1.xpose.msra.mxu0 0.0
    %69 = vmatprep.subr.mxu0 0.0
    %70 = vmatpush1.xpose.msra.mxu0 0.0
    %71 = vmatprep.subr.mxu0 0.0
    %72 = vmatpush1.xpose.msra.mxu0 0.0
    %73 = vmatprep.subr.mxu0 0.0
    %74 = vmatpush1.xpose.msra.mxu0 0.0
    %75 = vmatprep.subr.mxu0 0.0
    %76 = vmatpush1.xpose.msra.mxu0 0.0
    %77 = vmatprep.subr.mxu0 0.0
    %78 = vmatpush1.xpose.msra.mxu0 0.0
    %79 = vmatprep.subr.mxu0 0.0
    %80 = vmatpush1.xpose.msra.mxu0 %v61
    %81 = vmatprep.subr.mxu0 0.0
    %82 = vmatpush1.xpose.msra.mxu0 %v58
    %83 = vmatprep.subr.mxu0 0.0
    %84 = vmatpush1.xpose.msra.mxu0 %v55
    %85 = vmatprep.subr.mxu0 0.0
    %86 = vmatpush1.xpose.msra.mxu0 %v52
    %87 = vmatprep.subr.mxu0 0.0
    %88 = vmatpush1.xpose.msra.mxu0 %v49
    %89 = vmatprep.subr.mxu0 0.0
    %90 = vmatpush1.xpose.msra.mxu0 %v46
    %91 = vmatprep.subr.mxu0 0.0
    %92 = vmatpush1.xpose.msra.mxu0 %v43
    %93 = vmatprep.subr.mxu0 0.0
    %94 = vmatpush1.xpose.msra.mxu0 %v40
    %95 = vmatprep.subr.mxu0 0.0
    %96 = vmatpush2.xpose.msra.mxu0 0.0
    %97 = vmatprep.subr.mxu0 0.0
    %98 = vmatpush2.xpose.msra.mxu0 0.0
    %99 = vmatprep.subr.mxu0 0.0
    %100 = vmatpush2.xpose.msra.mxu0 0.0
    %101 = vmatprep.subr.mxu0 0.0
    %102 = vmatpush2.xpose.msra.mxu0 0.0
    %103 = vmatprep.subr.mxu0 0.0
    %104 = vmatpush2.xpose.msra.mxu0 0.0
    %105 = vmatprep.subr.mxu0 0.0
    %106 = vmatpush2.xpose.msra.mxu0 0.0
    %107 = vmatprep.subr.mxu0 0.0
    %108 = vmatpush2.xpose.msra.mxu0 0.0
    %109 = vmatprep.subr.mxu0 0.0
    %110 = vmatpush2.xpose.msra.mxu0 0.0
    %111 = vmatprep.subr.mxu0 0.0
    %112 = vmatpush2.xpose.msra.mxu0 0.0
    %113 = vmatprep.subr.mxu0 0.0
    %114 = vmatpush2.xpose.msra.mxu0 0.0
    %115 = vmatprep.subr.mxu0 0.0
    %116 = vmatpush2.xpose.msra.mxu0 0.0
    %117 = vmatprep.subr.mxu0 0.0
    %118 = vmatpush2.xpose.msra.mxu0 0.0
    %119 = vmatprep.subr.mxu0 0.0
    %120 = vmatpush2.xpose.msra.mxu0 0.0
    %121 = vmatprep.subr.mxu0 0.0
    %122 = vmatpush2.xpose.msra.mxu0 0.0
    %123 = vmatprep.subr.mxu0 0.0
    %124 = vmatpush2.xpose.msra.mxu0 0.0
    %125 = vmatprep.subr.mxu0 0.0
    %126 = vmatpush2.xpose.msra.mxu0 0.0
    %127 = vmatprep.mubr.f32.mxu0 0.0
    %128 = vmatmul.mubr.f32.gmra.mxu0 %v34
    %v129 = vpop.f32.mrf.mxu0
    %v130 = vadd.f32 %v30, %v129
    %v131 = vpop.f32.mrf.mxu0
    %132 = vmatprep.mubr.f32.mxu0 0.0
    %133 = vmatmul.mubr.f32.gmra.mxu0 %v37
    %v134 = vpop.f32.mrf.mxu0
    %v135 = vadd.f32 %v30, %v134
    %v136 = vpop.f32.mrf.mxu0
    %137 = vdwg.mxu0
    %vm138 = vcmask 523264
    %139 = vst.msk [vmem:[#allocation2] sm:$0xff] %vm138, %v130
    %140 = vst.msk [vmem:[#allocation2 + $0x8] sm:$0xff] %vm138, %v135
    // Predicated region
    $region14: #{tpu_custom_call.1} parent=1 // pred_check
      _
    $region15: #{tpu_custom_call.1} parent=1 // pred_check_branch
      %142 = sbr.rel (0) target = $region17
    $region16: #{tpu_custom_call.1} parent=1 // pred_region
      %s144 = ssub.s32 256, 256
      %145 = vsyncadd [#allocation3], %s144
      %s146 = sshll.u32 [#allocation2], 4
      %s147 = int_to_ptr.vmem [resolvable:$true] %s146
      %152 = dma.vmem_to_hbm [thread:$0]  %s147, 256, %s3, [#allocation3], 128, 128, 8
    $region17: #{tpu_custom_call.1} parent=1 // pred_fallthru
      _
    // Predicated region
    $region18: #{tpu_custom_call.1} parent=1 // pred_check
      _
    $region19: #{tpu_custom_call.1} parent=1 // pred_check_branch
      %154 = sbr.rel (0) target = $region21
    $region20: #{tpu_custom_call.1} parent=1 // pred_region
      %155 = dma.done [#allocation3], 256
    $region21: #{tpu_custom_call.1} parent=1 // pred_fallthru
      _
    %156 = vsyncpa [#allocation3], 1

</llo_original>
